<compile_context>
chip_gen: v7x
topology: tpu7x:2x2x1
jax: 0.10.0
libtpu: 0.0.40
codegen_flags: <defaults>
</compile_context>

<pallas_src>
from functools import partial

import jax
import jax.numpy as jnp
import numpy as np
from jax.experimental import pallas as pl
from jax.experimental.pallas import tpu as pltpu


def _round_up(x, m):
    return (x + m - 1) // m * m


def _pick_tile(dim, max_tile, align=128):
    """Pad `dim` to a multiple of `align`, pick the largest tile <= max_tile
    that is a multiple of `align` and divides the padded size."""
    padded = _round_up(max(dim, 1), align)
    tile = align
    cand = align
    while cand <= min(max_tile, padded):
        if padded % cand == 0:
            tile = cand
        cand += align
    return tile, padded


def _gram_style_kernel(i_idx_ref, j_idx_ref, a_ref, b_ref, tgt_ref,
                       g_ref, loss_ref, *, inv_norm, tk, num_targets,
                       a_resident):
    """One (i, j) lower-triangular Gram tile plus its per-target loss partials.

    i_idx_ref : (P,)          pair -> i tile index          (SMEM, prefetch)
    j_idx_ref : (P,)          pair -> j tile index          (SMEM, prefetch)
    a_ref     : (tm, Kp|tk)   feature rows, i-block         (VMEM)
    b_ref     : (tn, tk)      feature rows, j-block         (VMEM)
    tgt_ref   : (T, tm, tn)   stacked target Gram tiles     (VMEM)
    g_ref     : (tm, tn)      resident f32 output Gram tile (VMEM)
    loss_ref  : (1, T)        per-target sum((G-T_t)^2)     (SMEM)
    """
    p = pl.program_id(0)
    k = pl.program_id(1)

    @pl.when(k == 0)
    def _():
        g_ref[...] = jnp.zeros_like(g_ref)

    if a_resident:
        # K-resident LHS strip: slice out the current k chunk (lane-aligned).
        a = a_ref[:, pl.ds(pl.multiple_of(k * tk, 128), tk)]
    else:
        a = a_ref[...]

    # Contract the K axis of both feature views directly on the MXU; no
    # explicit transpose of the RHS tile.  Accumulate in the resident f32
    # output tile (no separate scratch accumulator).
    g_ref[...] += jax.lax.dot_general(
        a, b_ref[...],
        dimension_numbers=(((1,), (1,)), ((), ())),
        preferred_element_type=jnp.float32,
    )

    @pl.when(k == pl.num_programs(1) - 1)
    def _():
        g = g_ref[...] * inv_norm
        g_ref[...] = g
        # Off-diagonal tiles (i > j): the mirrored (j, i) tile contributes an
        # identical amount (G and every target Gram are symmetric), so count
        # this tile twice instead of visiting the mirror.
        factor = jnp.where(i_idx_ref[p] > j_idx_ref[p],
                           jnp.float32(2.0), jnp.float32(1.0))
        for t in range(num_targets):          # T is small and static
            d = g - tgt_ref[t]
            loss_ref[0, t] = factor * jnp.sum(d * d)


def nst_style_loss_forward(x, target_grams, weights, *,
                           compute_dtype=jnp.bfloat16,
                           max_tile_m=512, max_tile_k=1024,
                           vmem_budget_bytes=40 * 1024 * 1024):
    """x: (B, H, W, C); target_grams: (T, M, M); weights: (T,).

    Returns (x, G, loss): passthrough input, Gram matrix of x (f32), and the
    weighted sum of mean-MSE losses against each target Gram matrix.
    """
    B, H, W, C = x.shape
    M, K = B * H, W * C
    T = int(target_grams.shape[0])
    norm = float(B * H * W * C)

    w = weights.astype(jnp.float32)
    tg = target_grams.astype(jnp.float32)

    # Glue reshape: NHWC -> (M, K) feature matrix.  bf16 by default: the
    # kernel is HBM-bound with f32 features, and accumulation stays f32.
    feat = x.reshape(M, K).astype(compute_dtype)
    itemsize = jnp.dtype(compute_dtype).itemsize

    # --- VMEM-budget-aware tile / residency selection -----------------------
    # Budget is conservative so the config also fits v7x (64 MiB physical per
    # TensorCore); vmem_limit_bytes is set explicitly below so v5e's 16 MiB
    # default scoped limit does not reject the K-resident strip.
    def _vmem_bytes(tm_, tk_, kp_, a_res):
        a_b = 2 * tm_ * (kp_ if a_res else tk_) * itemsize  # LHS, dbl-buffered
        b_b = 2 * tm_ * tk_ * itemsize                      # RHS tile
        t_b = 2 * T * tm_ * tm_ * 4                         # f32 target stack
        g_b = 2 * tm_ * tm_ * 4                             # resident f32 G
        return a_b + b_b + t_b + g_b

    def _choose_config():
        for mt in (max_tile_m, 256, 128):
            tm_c, mp_c = _pick_tile(M, mt)
            for a_res in (True, False):
                for kt in (max_tile_k, 512, 256, 128):
                    tk_c, kp_c = _pick_tile(K, kt)
                    if _vmem_bytes(tm_c, tk_c, kp_c, a_res) <= vmem_budget_bytes:
                        return tm_c, mp_c, tk_c, kp_c, a_res
        tm_c, mp_c = _pick_tile(M, 128)
        tk_c, kp_c = _pick_tile(K, 128)
        return tm_c, mp_c, tk_c, kp_c, False

    tm, Mp, tk, Kp, a_resident = _choose_config()
    tn = tm
    gm, gk = Mp // tm, Kp // tk

    # Zero-pad to lane-dense tile multiples.  Padded feature rows are zero, so
    # padded Gram entries are exactly zero; targets are zero-padded too, so
    # the padded region contributes nothing to the loss and the MSE
    # denominator stays the original M*M.
    feat_p = jnp.pad(feat, ((0, Mp - M), (0, Kp - K)))
    tg_p = jnp.pad(tg, ((0, 0), (0, Mp - M), (0, Mp - M)))

    # Lower-triangular tile pairs (Gram symmetry): i outer so the K-resident
    # LHS strip is fetched once per i.
    pairs = [(i, j) for i in range(gm) for j in range(i + 1)]
    num_pairs = len(pairs)
    i_arr = jnp.asarray(np.array([p[0] for p in pairs], dtype=np.int32))
    j_arr = jnp.asarray(np.array([p[1] for p in pairs], dtype=np.int32))

    grid = (num_pairs, gk)

    est = _vmem_bytes(tm, tk, Kp, a_resident)
    vmem_limit = int(min(max(est + est // 4, 32 * 1024 * 1024),
                         56 * 1024 * 1024))

    flops = 2 * num_pairs * tm * tn * Kp
    a_bytes = (Mp * Kp if a_resident else num_pairs * tm * Kp) * itemsize
    b_bytes = num_pairs * tn * Kp * itemsize
    t_bytes = num_pairs * T * tm * tn * 4
    g_bytes = num_pairs * tm * tn * 4
    cost = pl.CostEstimate(flops=flops, transcendentals=0,
                           bytes_accessed=a_bytes + b_bytes + t_bytes + g_bytes)

    kernel = partial(_gram_style_kernel, inv_norm=1.0 / norm, tk=tk,
                     num_targets=T, a_resident=a_resident)

    if a_resident:
        a_spec = pl.BlockSpec((tm, Kp), lambda p, k, ii, jj: (ii[p], 0))
    else:
        a_spec = pl.BlockSpec((tm, tk), lambda p, k, ii, jj: (ii[p], k))

    g_pad, loss_parts = pl.pallas_call(
        kernel,
        out_shape=(
            jax.ShapeDtypeStruct((Mp, Mp), jnp.float32),
            jax.ShapeDtypeStruct((num_pairs, T), jnp.float32),
        ),
        grid_spec=pltpu.PrefetchScalarGridSpec(
            num_scalar_prefetch=2,          # (i_idx, j_idx) pair lists
            grid=grid,
            in_specs=[
                a_spec,                                                   # feat rows i
                pl.BlockSpec((tn, tk), lambda p, k, ii, jj: (jj[p], k)),  # feat rows j
                pl.BlockSpec((T, tm, tn),
                             lambda p, k, ii, jj: (0, ii[p], jj[p])),     # targets
            ],
            out_specs=(
                pl.BlockSpec((tm, tn), lambda p, k, ii, jj: (ii[p], jj[p])),
                pl.BlockSpec((1, T), lambda p, k, ii, jj: (p, 0),
                             memory_space=pltpu.MemorySpace.SMEM),
            ),
        ),
        compiler_params=pltpu.CompilerParams(
            dimension_semantics=("parallel", "arbitrary"),
            vmem_limit_bytes=vmem_limit),
        cost_estimate=cost,
    )(i_arr, j_arr, feat_p, feat_p, tg_p)

    # Mirror the block-lower-triangular Gram into the full symmetric matrix.
    blk = jnp.arange(Mp, dtype=jnp.int32) // tm
    lower = blk[:, None] >= blk[None, :]
    strict = blk[:, None] > blk[None, :]
    g_low = jnp.where(lower, g_pad, 0.0)
    G_full = g_low + jnp.where(strict, g_pad, 0.0).T
    G = G_full[:M, :M]

    # mse_loss default reduction='mean' over the (M, M) Gram matrix.
    per_target = jnp.sum(loss_parts, axis=0)           # (T,)
    loss = jnp.dot(per_target, w) / jnp.float32(M * M)

    return x, G, loss


def _gram_ref(x):
    """Pure-JAX reference replicating the PyTorch gram_matrix exactly."""
    B, H, W, C = x.shape
    feat = x.reshape(B * H, W * C).astype(jnp.float32)
    return (feat @ feat.T) / (B * H * W * C)


if __name__ == "__main__":
    # Small deterministic shapes consistent with the module's gram_matrix
    # view: (batch, H, W, feature_maps).
    B, H, W, C = 2, 16, 16, 4
    T = 2  # number of style targets

    key = jax.random.PRNGKey(0)
    k_in, k_s0, k_s1 = jax.random.split(key, 3)

    x = jax.random.normal(k_in, (B, H, W, C), dtype=jnp.float32)

    # Target Gram matrices: in the original module these come from passing
    # style images through a backbone; here they are built deterministically
    # in-script from synthetic "style activations" (same shape as x).
    style_acts = [
        jax.random.normal(k_s0, (B, H, W, C), dtype=jnp.float32),
        jax.random.normal(k_s1, (B, H, W, C), dtype=jnp.float32),
    ]
    target_grams = jnp.stack([_gram_ref(a) for a in style_acts], axis=0)
    weights = jnp.array([1.0, 0.5], dtype=jnp.float32)

    # Pure-JAX reference of the PyTorch semantics.
    G_ref = _gram_ref(x)
    loss_ref = sum(
        jnp.mean((G_ref - target_grams[i]) ** 2) * weights[i] for i in range(T)
    )

    # f32 compute path: tight correctness check.
    out, G, loss = nst_style_loss_forward(x, target_grams, weights,
                                          compute_dtype=jnp.float32)
    jax.block_until_ready((out, G, loss))
    assert np.allclose(np.asarray(out), np.asarray(x)), "input passthrough mismatch"
    assert np.allclose(np.asarray(G), np.asarray(G_ref), rtol=1e-5, atol=1e-5), \
        "Gram matrix mismatch (f32 path)"
    assert np.allclose(np.asarray(loss), np.asarray(loss_ref),
                       rtol=2e-4, atol=1e-7), "loss mismatch (f32 path)"

    # bf16 compute path (default / performance config): looser tolerance.
    out16, G16, loss16 = nst_style_loss_forward(x, target_grams, weights)
    jax.block_until_ready((out16, G16, loss16))
    assert np.allclose(np.asarray(out16), np.asarray(x)), "input passthrough mismatch"
    assert np.allclose(np.asarray(G16), np.asarray(G_ref),
                       rtol=3e-2, atol=3e-3), "Gram matrix mismatch (bf16 path)"
    assert np.allclose(np.asarray(loss16), np.asarray(loss_ref),
                       rtol=5e-2, atol=1e-4), "loss mismatch (bf16 path)"

    print("KERNEL_OK")
</pallas_src>

<mosaic_0001>
module attributes {stable_mosaic.version = 11 : i64} {
  func.func @_gram_style_kernel(%arg0: i32, %arg1: i32, %arg2: memref<1xi32, #tpu.memory_space<smem>>, %arg3: memref<1xi32, #tpu.memory_space<smem>>, %arg4: memref<128x128xf32, #tpu.memory_space<vmem>>, %arg5: memref<128x128xf32, #tpu.memory_space<vmem>>, %arg6: memref<2x128x128xf32, #tpu.memory_space<vmem>>, %arg7: memref<128x128xf32, #tpu.memory_space<vmem>>, %arg8: memref<1x2xf32, #tpu.memory_space<smem>>) attributes {dimension_semantics = [#tpu.dimension_semantics<parallel>, #tpu.dimension_semantics<arbitrary>], iteration_bounds = array<i64: 1, 1>, scalar_prefetch = 2 : i64, scratch_operands = 0 : i64, tpu.core_type = #tpu.core_type<tc>, window_params = [{transform_indices = @transform_0, window_bounds = array<i64: 128, 128>}, {transform_indices = @transform_1, window_bounds = array<i64: 128, 128>}, {transform_indices = @transform_2, window_bounds = array<i64: 2, 128, 128>}, {transform_indices = @transform_3, window_bounds = array<i64: 128, 128>}, {transform_indices = @transform_4, window_bounds = array<i64: 1, 2>}]} {
    %c0_i32 = arith.constant 0 : i32
    %0 = arith.cmpi eq, %arg1, %c0_i32 : i32
    %1 = arith.extui %0 : i1 to i32
    %c0_i32_0 = arith.constant 0 : i32
    %2 = arith.cmpi ne, %1, %c0_i32_0 : i32
    scf.if %2 {
      %cst_9 = arith.constant 0.000000e+00 : f32
      %15 = vector.broadcast %cst_9 : f32 to vector<128x128xf32>
      %c0_10 = arith.constant 0 : index
      %c0_11 = arith.constant 0 : index
      %16 = vector.load %arg7[%c0_10, %c0_11] : memref<128x128xf32, #tpu.memory_space<vmem>>, vector<128x128xf32>
      tpu.vector_store %arg7[%c0_10, %c0_11], %15 {strides = array<i32>} : memref<128x128xf32, #tpu.memory_space<vmem>>, vector<128x128xf32>,
    } else {
    }
    %c128_i32 = arith.constant 128 : i32
    %3 = arith.muli %arg1, %c128_i32 : i32
    %4 = tpu.assume_multiple %3, 128 : i32
    %c0 = arith.constant 0 : index
    %5 = arith.index_cast %4 : i32 to index
    %6 = vector.load %arg4[%c0, %5] : memref<128x128xf32, #tpu.memory_space<vmem>>, vector<128x128xf32>
    %c0_1 = arith.constant 0 : index
    %c0_2 = arith.constant 0 : index
    %7 = vector.load %arg7[%c0_1, %c0_2] : memref<128x128xf32, #tpu.memory_space<vmem>>, vector<128x128xf32>
    %c0_3 = arith.constant 0 : index
    %c0_4 = arith.constant 0 : index
    %8 = vector.load %arg5[%c0_3, %c0_4] : memref<128x128xf32, #tpu.memory_space<vmem>>, vector<128x128xf32>
    %cst = arith.constant dense<0.000000e+00> : vector<128x128xf32>
    %9 = tpu.matmul %6, %8, %cst {dimension_numbers = #tpu.dot_dimension_numbers<[1], [1], [0], [0], [0, 0, 1, 0], [], []>} : vector<128x128xf32>, vector<128x128xf32>, vector<128x128xf32> -> vector<128x128xf32>
    %10 = arith.addf %7, %9 : vector<128x128xf32>
    %c0_5 = arith.constant 0 : index
    %c0_6 = arith.constant 0 : index
    %11 = vector.load %arg7[%c0_5, %c0_6] : memref<128x128xf32, #tpu.memory_space<vmem>>, vector<128x128xf32>
    tpu.vector_store %arg7[%c0_5, %c0_6], %10 {strides = array<i32>} : memref<128x128xf32, #tpu.memory_space<vmem>>, vector<128x128xf32>,
    %c0_i32_7 = arith.constant 0 : i32
    %12 = arith.cmpi eq, %arg1, %c0_i32_7 : i32
    %13 = arith.extui %12 : i1 to i32
    %c0_i32_8 = arith.constant 0 : i32
    %14 = arith.cmpi ne, %13, %c0_i32_8 : i32
    scf.if %14 {
      %c0_9 = arith.constant 0 : index
      %c0_10 = arith.constant 0 : index
      %15 = vector.load %arg7[%c0_9, %c0_10] : memref<128x128xf32, #tpu.memory_space<vmem>>, vector<128x128xf32>
      %cst_11 = arith.constant 4.8828125E-4 : f32
      %16 = vector.broadcast %cst_11 : f32 to vector<128x128xf32>
      %17 = arith.mulf %15, %16 : vector<128x128xf32>
      %c0_12 = arith.constant 0 : index
      %c0_13 = arith.constant 0 : index
      %18 = vector.load %arg7[%c0_12, %c0_13] : memref<128x128xf32, #tpu.memory_space<vmem>>, vector<128x128xf32>
      tpu.vector_store %arg7[%c0_12, %c0_13], %17 {strides = array<i32>} : memref<128x128xf32, #tpu.memory_space<vmem>>, vector<128x128xf32>,
      %19 = arith.index_cast %arg0 : i32 to index
      %20 = memref.load %arg2[%19] : memref<1xi32, #tpu.memory_space<smem>>
      %21 = arith.index_cast %arg0 : i32 to index
      %22 = memref.load %arg3[%21] : memref<1xi32, #tpu.memory_space<smem>>
      %23 = arith.cmpi sgt, %20, %22 : i32
      %cst_14 = arith.constant 2.000000e+00 : f32
      %cst_15 = arith.constant 1.000000e+00 : f32
      %24 = arith.select %23, %cst_14, %cst_15 : f32
      %c0_16 = arith.constant 0 : index
      %c0_17 = arith.constant 0 : index
      %c0_18 = arith.constant 0 : index
      %25 = vector.load %arg6[%c0_16, %c0_17, %c0_18] : memref<2x128x128xf32, #tpu.memory_space<vmem>>, vector<1x128x128xf32>
      %26 = vector.shape_cast %25 : vector<1x128x128xf32> to vector<128x128xf32>
      %27 = arith.subf %17, %26 : vector<128x128xf32>
      %28 = arith.mulf %27, %27 : vector<128x128xf32>
      %29 = vector.shape_cast %28 : vector<128x128xf32> to vector<1x128x128xf32>
      %cst_19 = arith.constant dense<0.000000e+00> : vector<1xf32>
      %30 = vector.multi_reduction <add>, %29, %cst_19 [1, 2] : vector<1x128x128xf32> to vector<1xf32>
      %31 = vector.shape_cast %30 : vector<1xf32> to vector<1x1x1xf32>
      %32 = vector.extract %31[0, 0, 0] : f32 from vector<1x1x1xf32>
      %33 = arith.mulf %24, %32 : f32
      %c0_20 = arith.constant 0 : index
      %c0_21 = arith.constant 0 : index
      %34 = memref.load %arg8[%c0_20, %c0_21] : memref<1x2xf32, #tpu.memory_space<smem>>
      memref.store %33, %arg8[%c0_20, %c0_21] : memref<1x2xf32, #tpu.memory_space<smem>>
      %c1 = arith.constant 1 : index
      %c0_22 = arith.constant 0 : index
      %c0_23 = arith.constant 0 : index
      %35 = vector.load %arg6[%c1, %c0_22, %c0_23] : memref<2x128x128xf32, #tpu.memory_space<vmem>>, vector<1x128x128xf32>
      %36 = vector.shape_cast %35 : vector<1x128x128xf32> to vector<128x128xf32>
      %37 = arith.subf %17, %36 : vector<128x128xf32>
      %38 = arith.mulf %37, %37 : vector<128x128xf32>
      %39 = vector.shape_cast %38 : vector<128x128xf32> to vector<1x128x128xf32>
      %cst_24 = arith.constant dense<0.000000e+00> : vector<1xf32>
      %40 = vector.multi_reduction <add>, %39, %cst_24 [1, 2] : vector<1x128x128xf32> to vector<1xf32>
      %41 = vector.shape_cast %40 : vector<1xf32> to vector<1x1x1xf32>
      %42 = vector.extract %41[0, 0, 0] : f32 from vector<1x1x1xf32>
      %43 = arith.mulf %24, %42 : f32
      %c0_25 = arith.constant 0 : index
      %c1_26 = arith.constant 1 : index
      %44 = memref.load %arg8[%c0_25, %c1_26] : memref<1x2xf32, #tpu.memory_space<smem>>
      memref.store %43, %arg8[%c0_25, %c1_26] : memref<1x2xf32, #tpu.memory_space<smem>>
    } else {
    }
    return
  }
  func.func @transform_0(%arg0: i32, %arg1: i32, %arg2: memref<1xi32, #tpu.memory_space<smem>>, %arg3: memref<1xi32, #tpu.memory_space<smem>>) -> (i32, i32) {
    %0 = arith.index_cast %arg0 : i32 to index
    %1 = memref.load %arg2[%0] : memref<1xi32, #tpu.memory_space<smem>>
    %c0_i32 = arith.constant 0 : i32
    %c0_i32_0 = arith.constant 0 : i32
    return %1, %c0_i32 : i32, i32
  }
  func.func @transform_1(%arg0: i32, %arg1: i32, %arg2: memref<1xi32, #tpu.memory_space<smem>>, %arg3: memref<1xi32, #tpu.memory_space<smem>>) -> (i32, i32) {
    %0 = arith.index_cast %arg0 : i32 to index
    %1 = memref.load %arg3[%0] : memref<1xi32, #tpu.memory_space<smem>>
    %c0_i32 = arith.constant 0 : i32
    return %1, %arg1 : i32, i32
  }
  func.func @transform_2(%arg0: i32, %arg1: i32, %arg2: memref<1xi32, #tpu.memory_space<smem>>, %arg3: memref<1xi32, #tpu.memory_space<smem>>) -> (i32, i32, i32) {
    %0 = arith.index_cast %arg0 : i32 to index
    %1 = memref.load %arg2[%0] : memref<1xi32, #tpu.memory_space<smem>>
    %2 = arith.index_cast %arg0 : i32 to index
    %3 = memref.load %arg3[%2] : memref<1xi32, #tpu.memory_space<smem>>
    %c0_i32 = arith.constant 0 : i32
    %c0_i32_0 = arith.constant 0 : i32
    return %c0_i32, %1, %3 : i32, i32, i32
  }
  func.func @transform_3(%arg0: i32, %arg1: i32, %arg2: memref<1xi32, #tpu.memory_space<smem>>, %arg3: memref<1xi32, #tpu.memory_space<smem>>) -> (i32, i32) {
    %0 = arith.index_cast %arg0 : i32 to index
    %1 = memref.load %arg2[%0] : memref<1xi32, #tpu.memory_space<smem>>
    %2 = arith.index_cast %arg0 : i32 to index
    %3 = memref.load %arg3[%2] : memref<1xi32, #tpu.memory_space<smem>>
    %c0_i32 = arith.constant 0 : i32
    return %1, %3 : i32, i32
  }
  func.func @transform_4(%arg0: i32, %arg1: i32, %arg2: memref<1xi32, #tpu.memory_space<smem>>, %arg3: memref<1xi32, #tpu.memory_space<smem>>) -> (i32, i32) {
    %c0_i32 = arith.constant 0 : i32
    %c0_i32_0 = arith.constant 0 : i32
    return %arg0, %c0_i32 : i32, i32
  }
}

</mosaic_0001>

<llo_original>
// kernel: tpu_custom_call.1
$region0: #{tpu_custom_call.1}
  #allocation0 [shape = 'u32[]', space=smem, size = 0x4, offset = 0x4, fixed_abs, tag = 'smem constant byte address 0x4 - core index']
  #allocation1 [shape = 'u32[144,128]{1,0:T(1,128)}', space=vmem, size = 0x12000, scoped, tag = 'internal scratch']
  #allocation2 [shape = 's32[1]{0}', space=sflag, size = 0x4, scoped, tag = 'scoped memory for tpu_custom_call.1']
  #allocation3 [shape = 's32[1]{0:T(128)S(6)}', space=smem, size = 0x200, scoped, tag = 'prefetched SMEM operand 0']
  #allocation4 [shape = 's32[1]{0:T(128)S(6)}', space=smem, size = 0x200, scoped, tag = 'prefetched SMEM operand 1']
  %s0 = inlined_call_operand.<no memory space> [shape: s32[1], index: 0, kind: input, shape index: {}]
  %s1 = inlined_call_operand.<no memory space> [shape: s32[1], index: 1, kind: input, shape index: {}]
  %s2 = inlined_call_operand.hbm [shape: f32[128,128], index: 2, kind: input, shape index: {}]
  %s3 = inlined_call_operand.hbm [shape: f32[128,128], index: 3, kind: input, shape index: {}]
  %s4 = inlined_call_operand.hbm [shape: f32[2,128,128], index: 4, kind: input, shape index: {}]
  %s5 = inlined_call_operand.hbm [shape: f32[128,128], index: 5, kind: output, shape index: {0}]
  %s6 = inlined_call_operand.hbm [shape: f32[1,2], index: 6, kind: output, shape index: {1}]
  %7 = xla_tuple %s5, %s6
  %s8 = sld [smem:[#allocation0]]
  $region50: #{tpu_custom_call.1} parent=0
    _
  %s10 = ssub.s32 1, %s8
  %s11 = scalar_select 0, %s10, %s8
  %12 = sst [smem:[#allocation3]] %s0
  %13 = sst [smem:[#allocation4]] %s1
  $region1: #{tpu_custom_call.1} parent=0
    #allocation5 [shape = 'u8[65536]{0}', space=vmem, size = 0x10000, scoped, tag = 'input window, operand 2, single buffered']
    #allocation6 [shape = 's32[1]{0}', space=sflag, size = 0x4, scoped, tag = 'scoped memory for tpu_custom_call.1']
    #allocation7 [shape = 's32[1]{0}', space=sflag, size = 0x4, scoped, tag = 'scoped memory for tpu_custom_call.1']
    #allocation8 [shape = 's32[1]{0}', space=sflag, size = 0x4, scoped, tag = 'scoped memory for tpu_custom_call.1']
    #allocation9 [shape = 'u8[65536]{0}', space=vmem, size = 0x10000, scoped, tag = 'input window, operand 3, single buffered']
    #allocation10 [shape = 's32[1]{0}', space=sflag, size = 0x4, scoped, tag = 'scoped memory for tpu_custom_call.1']
    #allocation11 [shape = 'u8[131072]{0}', space=vmem, size = 0x20000, scoped, tag = 'input window, operand 4, single buffered']
    #allocation12 [shape = 'u8[65536]{0}', space=vmem, size = 0x10000, scoped, tag = 'output window, operand 0, single buffered']
    #allocation13 [shape = 'u8[512]{0}', space=smem, size = 0x200, scoped, tag = 'output window, operand 1, single buffered']
    %14 = vsyncpa [#allocation6], 0
    %15 = vsyncpa [#allocation10], 0
    %16 = vsyncpa [#allocation7], 0
    %17 = vsyncpa [#allocation8], 0
    // Predicated region
    $region2: #{tpu_custom_call.1} parent=1 // pred_check
      _
    $region3: #{tpu_custom_call.1} parent=1 // pred_check_branch
      %19 = sbr.rel (0) target = $region5
    $region4: #{tpu_custom_call.1} parent=1 // pred_region
      %s20 = sld [smem:[#allocation3]]
      %s21 = smul.u32 16, %s20
      %s23 = ssub.s32 2048, 2048
      %24 = vsyncadd [#allocation6], %s23
      %s25 = smul.addr %s21, 128
      %s26 = scalar_lea.hbm %s2, %s25
      %s27 = sshll.u32 [#allocation5], 4
      %s28 = int_to_ptr.vmem [resolvable:$true] %s27
      %33 = dma.hbm_to_vmem [thread:$0]  %s26, 2048, %s28, [#allocation6], 128, 128, 8
    $region5: #{tpu_custom_call.1} parent=1 // pred_fallthru
      _
    // Predicated region
    $region6: #{tpu_custom_call.1} parent=1 // pred_check
      _
    $region7: #{tpu_custom_call.1} parent=1 // pred_check_branch
      %35 = sbr.rel (0) target = $region9
    $region8: #{tpu_custom_call.1} parent=1 // pred_region
      %s36 = sld [smem:[#allocation4]]
      %s37 = smul.u32 16, %s36
      %s39 = ssub.s32 2048, 2048
      %40 = vsyncadd [#allocation10], %s39
      %s41 = smul.addr %s37, 128
      %s42 = scalar_lea.hbm %s3, %s41
      %s43 = sshll.u32 [#allocation9], 4
      %s44 = int_to_ptr.vmem [resolvable:$true] %s43
      %49 = dma.hbm_to_vmem [thread:$0]  %s42, 2048, %s44, [#allocation10], 128, 128, 8
    $region9: #{tpu_custom_call.1} parent=1 // pred_fallthru
      _
    // Predicated region
    $region10: #{tpu_custom_call.1} parent=1 // pred_check
      _
    $region11: #{tpu_custom_call.1} parent=1 // pred_check_branch
      %51 = sbr.rel (0) target = $region13
    $region12: #{tpu_custom_call.1} parent=1 // pred_region
      %s52 = sld [smem:[#allocation3]]
      %s53 = sld [smem:[#allocation4]]
      %s54 = smul.u32 16, %s52
      %s56 = ssub.s32 4096, 4096
      %57 = vsyncadd [#allocation10], %s56
      %s58 = sadd.s32 %s53, %s54
      %s59 = smul.addr %s58, 128
      %s60 = scalar_lea.hbm %s4, %s59
      %s61 = sshll.u32 [#allocation11], 4
      %s62 = int_to_ptr.vmem [resolvable:$true] %s61
      %67 = dma.hbm_to_vmem [thread:$0]  %s60, 4096, %s62, [#allocation10], 128, 128, 8
    $region13: #{tpu_custom_call.1} parent=1 // pred_fallthru
      _
    // Predicated region
    $region14: #{tpu_custom_call.1} parent=1 // pred_check
      _
    $region15: #{tpu_custom_call.1} parent=1 // pred_check_branch
      %69 = sbr.rel (0) target = $region17
    $region16: #{tpu_custom_call.1} parent=1 // pred_region
      %70 = dma.done [#allocation6], 2048
    $region17: #{tpu_custom_call.1} parent=1 // pred_fallthru
      _
    // Predicated region
    $region18: #{tpu_custom_call.1} parent=1 // pred_check
      _
    $region19: #{tpu_custom_call.1} parent=1 // pred_check_branch
      %72 = sbr.rel (0) target = $region21
    $region20: #{tpu_custom_call.1} parent=1 // pred_region
      %73 = dma.done [#allocation10], 2048
    $region21: #{tpu_custom_call.1} parent=1 // pred_fallthru
      _
    // Predicated region
    $region22: #{tpu_custom_call.1} parent=1 // pred_check
      _
    $region23: #{tpu_custom_call.1} parent=1 // pred_check_branch
      %75 = sbr.rel (0) target = $region25
    $region24: #{tpu_custom_call.1} parent=1 // pred_region
      %76 = dma.done [#allocation10], 4096
    $region25: #{tpu_custom_call.1} parent=1 // pred_fallthru
      _
    %s77 = sld [smem:[#allocation3]]
    %s78 = smul.u32 16, %s77
    %s79 = sld [smem:[#allocation4]]
    %s80 = smul.u32 16, %s79
    %s81 = sld [smem:[#allocation3]]
    %s82 = sld [smem:[#allocation4]]
    %s83 = smul.u32 16, %s81
    %s84 = sld [smem:[#allocation3]]
    %s85 = sld [smem:[#allocation4]]
    %s86 = smul.u32 16, %s84
    %p87 = scmp.eq.s32.totalorder 0, 0
    // Predicated region
    $region26: #{tpu_custom_call.1} parent=1 // pred_check
      %p88 = pneg %p87
    $region27: #{tpu_custom_call.1} parent=1 // pred_check_branch
      %90 = sbr.rel (%p88) target = $region29
    $region28: #{tpu_custom_call.1} parent=1 // pred_region
      %91 = vst [vmem:[#allocation12] sm:$0xff] 0.0
      %92 = vst [vmem:[#allocation12 + $0x8] sm:$0xff] 0.0
      %93 = vst [vmem:[#allocation12 + $0x10] sm:$0xff] 0.0
      %94 = vst [vmem:[#allocation12 + $0x18] sm:$0xff] 0.0
      %95 = vst [vmem:[#allocation12 + $0x20] sm:$0xff] 0.0
      %96 = vst [vmem:[#allocation12 + $0x28] sm:$0xff] 0.0
      %97 = vst [vmem:[#allocation12 + $0x30] sm:$0xff] 0.0
      %98 = vst [vmem:[#allocation12 + $0x38] sm:$0xff] 0.0
      %99 = vst [vmem:[#allocation12 + $0x40] sm:$0xff] 0.0
      %100 = vst [vmem:[#allocation12 + $0x48] sm:$0xff] 0.0
      %101 = vst [vmem:[#allocation12 + $0x50] sm:$0xff] 0.0
      %102 = vst [vmem:[#allocation12 + $0x58] sm:$0xff] 0.0
      %103 = vst [vmem:[#allocation12 + $0x60] sm:$0xff] 0.0
      %104 = vst [vmem:[#allocation12 + $0x68] sm:$0xff] 0.0
      %105 = vst [vmem:[#allocation12 + $0x70] sm:$0xff] 0.0
      %106 = vst [vmem:[#allocation12 + $0x78] sm:$0xff] 0.0
    $region29: #{tpu_custom_call.1} parent=1 // pred_fallthru
      _
    %s107 = smul.u32 0, 128
    %s108 = sshra.s32 %s107, 7
    %s109 = sand.u32 %s107, 127
    %s110 = scalar_lea.vmem [#allocation5], %s108
    %v111 = vld [vmem:[%s110] sm:$0xff]
    %v112 = vld [vmem:[%s110 + $0x8] sm:$0xff]
    %v113 = vld [vmem:[%s110 + $0x10] sm:$0xff]
    %v114 = vld [vmem:[%s110 + $0x18] sm:$0xff]
    %v115 = vld [vmem:[%s110 + $0x20] sm:$0xff]
    %v116 = vld [vmem:[%s110 + $0x28] sm:$0xff]
    %v117 = vld [vmem:[%s110 + $0x30] sm:$0xff]
    %v118 = vld [vmem:[%s110 + $0x38] sm:$0xff]
    %v119 = vld [vmem:[%s110 + $0x40] sm:$0xff]
    %v120 = vld [vmem:[%s110 + $0x48] sm:$0xff]
    %v121 = vld [vmem:[%s110 + $0x50] sm:$0xff]
    %v122 = vld [vmem:[%s110 + $0x58] sm:$0xff]
    %v123 = vld [vmem:[%s110 + $0x60] sm:$0xff]
    %v124 = vld [vmem:[%s110 + $0x68] sm:$0xff]
    %v125 = vld [vmem:[%s110 + $0x70] sm:$0xff]
    %v126 = vld [vmem:[%s110 + $0x78] sm:$0xff]
    %v127 = vld [vmem:[#allocation12] sm:$0xff]
    %v128 = vld [vmem:[#allocation12 + $0x8] sm:$0xff]
    %v129 = vld [vmem:[#allocation12 + $0x10] sm:$0xff]
    %v130 = vld [vmem:[#allocation12 + $0x18] sm:$0xff]
    %v131 = vld [vmem:[#allocation12 + $0x20] sm:$0xff]
    %v132 = vld [vmem:[#allocation12 + $0x28] sm:$0xff]
    %v133 = vld [vmem:[#allocation12 + $0x30] sm:$0xff]
    %v134 = vld [vmem:[#allocation12 + $0x38] sm:$0xff]
    %v135 = vld [vmem:[#allocation12 + $0x40] sm:$0xff]
    %v136 = vld [vmem:[#allocation12 + $0x48] sm:$0xff]
    %v137 = vld [vmem:[#allocation12 + $0x50] sm:$0xff]
    %v138 = vld [vmem:[#allocation12 + $0x58] sm:$0xff]
    %v139 = vld [vmem:[#allocation12 + $0x60] sm:$0xff]
    %v140 = vld [vmem:[#allocation12 + $0x68] sm:$0xff]
    %v141 = vld [vmem:[#allocation12 + $0x70] sm:$0xff]
    %v142 = vld [vmem:[#allocation12 + $0x78] sm:$0xff]
    %v143 = vld [vmem:[#allocation9] sm:$0xff]
    %v144 = vld [vmem:[#allocation9 + $0x8] sm:$0xff]
    %v145 = vld [vmem:[#allocation9 + $0x10] sm:$0xff]
    %v146 = vld [vmem:[#allocation9 + $0x18] sm:$0xff]
    %v147 = vld [vmem:[#allocation9 + $0x20] sm:$0xff]
    %v148 = vld [vmem:[#allocation9 + $0x28] sm:$0xff]
    %v149 = vld [vmem:[#allocation9 + $0x30] sm:$0xff]
    %v150 = vld [vmem:[#allocation9 + $0x38] sm:$0xff]
    %v151 = vld [vmem:[#allocation9 + $0x40] sm:$0xff]
    %v152 = vld [vmem:[#allocation9 + $0x48] sm:$0xff]
    %v153 = vld [vmem:[#allocation9 + $0x50] sm:$0xff]
    %v154 = vld [vmem:[#allocation9 + $0x58] sm:$0xff]
    %v155 = vld [vmem:[#allocation9 + $0x60] sm:$0xff]
    %v156 = vld [vmem:[#allocation9 + $0x68] sm:$0xff]
    %v157 = vld [vmem:[#allocation9 + $0x70] sm:$0xff]
    %v158 = vld [vmem:[#allocation9 + $0x78] sm:$0xff]
    %159 = vmatprep.subr.mxu0 0.0
    %160 = vmatpush1.xpose.msra.mxu0 %v143
    %161 = vmatprep.subr.mxu0 0.0
    %162 = vmatpush1.xpose.msra.mxu0 %v144
    %163 = vmatprep.subr.mxu0 0.0
    %164 = vmatpush1.xpose.msra.mxu0 %v145
    %165 = vmatprep.subr.mxu0 0.0
    %166 = vmatpush1.xpose.msra.mxu0 %v146
    %167 = vmatprep.subr.mxu0 0.0
    %168 = vmatpush1.xpose.msra.mxu0 %v147
    %169 = vmatprep.subr.mxu0 0.0
    %170 = vmatpush1.xpose.msra.mxu0 %v148
    %171 = vmatprep.subr.mxu0 0.0
    %172 = vmatpush1.xpose.msra.mxu0 %v149
    %173 = vmatprep.subr.mxu0 0.0
    %174 = vmatpush1.xpose.msra.mxu0 %v150
    %175 = vmatprep.subr.mxu0 0.0
    %176 = vmatpush1.xpose.msra.mxu0 %v151
    %177 = vmatprep.subr.mxu0 0.0
    %178 = vmatpush1.xpose.msra.mxu0 %v152
    %179 = vmatprep.subr.mxu0 0.0
    %180 = vmatpush1.xpose.msra.mxu0 %v153
    %181 = vmatprep.subr.mxu0 0.0
    %182 = vmatpush1.xpose.msra.mxu0 %v154
    %183 = vmatprep.subr.mxu0 0.0
    %184 = vmatpush1.xpose.msra.mxu0 %v155
    %185 = vmatprep.subr.mxu0 0.0
    %186 = vmatpush1.xpose.msra.mxu0 %v156
    %187 = vmatprep.subr.mxu0 0.0
    %188 = vmatpush1.xpose.msra.mxu0 %v157
    %189 = vmatprep.subr.mxu0 0.0
    %190 = vmatpush1.xpose.msra.mxu0 %v158
    %191 = vmatprep.subr.mxu0 0.0
    %192 = vmatpush1.xpose.msra.mxu0 0.0
    %193 = vmatprep.subr.mxu0 0.0
    %194 = vmatpush1.xpose.msra.mxu0 0.0
    %195 = vmatprep.subr.mxu0 0.0
    %196 = vmatpush1.xpose.msra.mxu0 0.0
    %197 = vmatprep.subr.mxu0 0.0
    %198 = vmatpush1.xpose.msra.mxu0 0.0
    %199 = vmatprep.subr.mxu0 0.0
    %200 = vmatpush1.xpose.msra.mxu0 0.0
    %201 = vmatprep.subr.mxu0 0.0
    %202 = vmatpush1.xpose.msra.mxu0 0.0
    %203 = vmatprep.subr.mxu0 0.0
    %204 = vmatpush1.xpose.msra.mxu0 0.0
    %205 = vmatprep.subr.mxu0 0.0
    %206 = vmatpush1.xpose.msra.mxu0 0.0
    %207 = vmatprep.subr.mxu0 0.0
    %208 = vmatpush1.xpose.msra.mxu0 0.0
    %209 = vmatprep.subr.mxu0 0.0
    %210 = vmatpush1.xpose.msra.mxu0 0.0
    %211 = vmatprep.subr.mxu0 0.0
    %212 = vmatpush1.xpose.msra.mxu0 0.0
    %213 = vmatprep.subr.mxu0 0.0
    %214 = vmatpush1.xpose.msra.mxu0 0.0
    %215 = vmatprep.subr.mxu0 0.0
    %216 = vmatpush1.xpose.msra.mxu0 0.0
    %217 = vmatprep.subr.mxu0 0.0
    %218 = vmatpush1.xpose.msra.mxu0 0.0
    %219 = vmatprep.subr.mxu0 0.0
    %220 = vmatpush1.xpose.msra.mxu0 0.0
    %221 = vmatprep.subr.mxu0 0.0
    %222 = vmatpush1.xpose.msra.mxu0 0.0
    %223 = vmatprep.mubr.f32.mxu0 0.0
    %224 = vmatmul.mubr.f32.gmra.mrb[0].mxu0 %v111
    %v225 = vpop.f32.mrb[0].mxu0
    %v226 = vadd.f32 0.0, %v225
    %v227 = vpop.f32.mrb[0].mxu0
    %228 = vmatprep.mubr.f32.mxu0 0.0
    %229 = vmatmul.mubr.f32.gmra.mrb[0].mxu0 %v112
    %v230 = vpop.f32.mrb[0].mxu0
    %v231 = vadd.f32 0.0, %v230
    %v232 = vpop.f32.mrb[0].mxu0
    %233 = vmatprep.mubr.f32.mxu0 0.0
    %234 = vmatmul.mubr.f32.gmra.mrb[0].mxu0 %v113
    %v235 = vpop.f32.mrb[0].mxu0
    %v236 = vadd.f32 0.0, %v235
    %v237 = vpop.f32.mrb[0].mxu0
    %238 = vmatprep.mubr.f32.mxu0 0.0
    %239 = vmatmul.mubr.f32.gmra.mrb[0].mxu0 %v114
    %v240 = vpop.f32.mrb[0].mxu0
    %v241 = vadd.f32 0.0, %v240
    %v242 = vpop.f32.mrb[0].mxu0
    %243 = vmatprep.mubr.f32.mxu0 0.0
    %244 = vmatmul.mubr.f32.gmra.mrb[0].mxu0 %v115
    %v245 = vpop.f32.mrb[0].mxu0
    %v246 = vadd.f32 0.0, %v245
    %v247 = vpop.f32.mrb[0].mxu0
    %248 = vmatprep.mubr.f32.mxu0 0.0
    %249 = vmatmul.mubr.f32.gmra.mrb[0].mxu0 %v116
    %v250 = vpop.f32.mrb[0].mxu0
    %v251 = vadd.f32 0.0, %v250
    %v252 = vpop.f32.mrb[0].mxu0
    %253 = vmatprep.mubr.f32.mxu0 0.0
    %254 = vmatmul.mubr.f32.gmra.mrb[0].mxu0 %v117
    %v255 = vpop.f32.mrb[0].mxu0
    %v256 = vadd.f32 0.0, %v255
    %v257 = vpop.f32.mrb[0].mxu0
    %258 = vmatprep.mubr.f32.mxu0 0.0
    %259 = vmatmul.mubr.f32.gmra.mrb[0].mxu0 %v118
    %v260 = vpop.f32.mrb[0].mxu0
    %v261 = vadd.f32 0.0, %v260
    %v262 = vpop.f32.mrb[0].mxu0
    %263 = vmatprep.mubr.f32.mxu0 0.0
    %264 = vmatmul.mubr.f32.gmra.mrb[0].mxu0 %v119
    %v265 = vpop.f32.mrb[0].mxu0
    %v266 = vadd.f32 0.0, %v265
    %v267 = vpop.f32.mrb[0].mxu0
    %268 = vmatprep.mubr.f32.mxu0 0.0
    %269 = vmatmul.mubr.f32.gmra.mrb[0].mxu0 %v120
    %v270 = vpop.f32.mrb[0].mxu0
    %v271 = vadd.f32 0.0, %v270
    %v272 = vpop.f32.mrb[0].mxu0
    %273 = vmatprep.mubr.f32.mxu0 0.0
    %274 = vmatmul.mubr.f32.gmra.mrb[0].mxu0 %v121
    %v275 = vpop.f32.mrb[0].mxu0
    %v276 = vadd.f32 0.0, %v275
    %v277 = vpop.f32.mrb[0].mxu0
    %278 = vmatprep.mubr.f32.mxu0 0.0
    %279 = vmatmul.mubr.f32.gmra.mrb[0].mxu0 %v122
    %v280 = vpop.f32.mrb[0].mxu0
    %v281 = vadd.f32 0.0, %v280
    %v282 = vpop.f32.mrb[0].mxu0
    %283 = vmatprep.mubr.f32.mxu0 0.0
    %284 = vmatmul.mubr.f32.gmra.mrb[0].mxu0 %v123
    %v285 = vpop.f32.mrb[0].mxu0
    %v286 = vadd.f32 0.0, %v285
    %v287 = vpop.f32.mrb[0].mxu0
    %288 = vmatprep.mubr.f32.mxu0 0.0
    %289 = vmatmul.mubr.f32.gmra.mrb[0].mxu0 %v124
    %v290 = vpop.f32.mrb[0].mxu0
    %v291 = vadd.f32 0.0, %v290
    %v292 = vpop.f32.mrb[0].mxu0
    %293 = vmatprep.mubr.f32.mxu0 0.0
    %294 = vmatmul.mubr.f32.gmra.mrb[0].mxu0 %v125
    %v295 = vpop.f32.mrb[0].mxu0
    %v296 = vadd.f32 0.0, %v295
    %v297 = vpop.f32.mrb[0].mxu0
    %298 = vmatprep.mubr.f32.mxu0 0.0
    %299 = vmatmul.mubr.f32.gmra.mrb[0].mxu0 %v126
    %v300 = vpop.f32.mrb[0].mxu0
    %v301 = vadd.f32 0.0, %v300
    %v302 = vpop.f32.mrb[0].mxu0
    %303 = vdwg.mxu0
    %v304 = vadd.f32 %v127, %v226
    %v305 = vadd.f32 %v128, %v231
    %v306 = vadd.f32 %v129, %v236
    %v307 = vadd.f32 %v130, %v241
    %v308 = vadd.f32 %v131, %v246
    %v309 = vadd.f32 %v132, %v251
    %v310 = vadd.f32 %v133, %v256
    %v311 = vadd.f32 %v134, %v261
    %v312 = vadd.f32 %v135, %v266
    %v313 = vadd.f32 %v136, %v271
    %v314 = vadd.f32 %v137, %v276
    %v315 = vadd.f32 %v138, %v281
    %v316 = vadd.f32 %v139, %v286
    %v317 = vadd.f32 %v140, %v291
    %v318 = vadd.f32 %v141, %v296
    %v319 = vadd.f32 %v142, %v301
    %320 = vst [vmem:[#allocation12] sm:$0xff] %v304
    %321 = vst [vmem:[#allocation12 + $0x8] sm:$0xff] %v305
    %322 = vst [vmem:[#allocation12 + $0x10] sm:$0xff] %v306
    %323 = vst [vmem:[#allocation12 + $0x18] sm:$0xff] %v307
    %324 = vst [vmem:[#allocation12 + $0x20] sm:$0xff] %v308
    %325 = vst [vmem:[#allocation12 + $0x28] sm:$0xff] %v309
    %326 = vst [vmem:[#allocation12 + $0x30] sm:$0xff] %v310
    %327 = vst [vmem:[#allocation12 + $0x38] sm:$0xff] %v311
    %328 = vst [vmem:[#allocation12 + $0x40] sm:$0xff] %v312
    %329 = vst [vmem:[#allocation12 + $0x48] sm:$0xff] %v313
    %330 = vst [vmem:[#allocation12 + $0x50] sm:$0xff] %v314
    %331 = vst [vmem:[#allocation12 + $0x58] sm:$0xff] %v315
    %332 = vst [vmem:[#allocation12 + $0x60] sm:$0xff] %v316
    %333 = vst [vmem:[#allocation12 + $0x68] sm:$0xff] %v317
    %334 = vst [vmem:[#allocation12 + $0x70] sm:$0xff] %v318
    %335 = vst [vmem:[#allocation12 + $0x78] sm:$0xff] %v319
    // Predicated region
    $region30: #{tpu_custom_call.1} parent=1 // pred_check
      %p336 = pneg %p87
    $region31: #{tpu_custom_call.1} parent=1 // pred_check_branch
      %338 = sbr.rel (%p336) target = $region33
    $region32: #{tpu_custom_call.1} parent=1 // pred_region
      %v339 = vld [vmem:[#allocation12] sm:$0xff]
      %v340 = vld [vmem:[#allocation12 + $0x8] sm:$0xff]
      %v341 = vld [vmem:[#allocation12 + $0x10] sm:$0xff]
      %v342 = vld [vmem:[#allocation12 + $0x18] sm:$0xff]
      %v343 = vld [vmem:[#allocation12 + $0x20] sm:$0xff]
      %v344 = vld [vmem:[#allocation12 + $0x28] sm:$0xff]
      %v345 = vld [vmem:[#allocation12 + $0x30] sm:$0xff]
      %v346 = vld [vmem:[#allocation12 + $0x38] sm:$0xff]
      %v347 = vld [vmem:[#allocation12 + $0x40] sm:$0xff]
      %v348 = vld [vmem:[#allocation12 + $0x48] sm:$0xff]
      %v349 = vld [vmem:[#allocation12 + $0x50] sm:$0xff]
      %v350 = vld [vmem:[#allocation12 + $0x58] sm:$0xff]
      %v351 = vld [vmem:[#allocation12 + $0x60] sm:$0xff]
      %v352 = vld [vmem:[#allocation12 + $0x68] sm:$0xff]
      %v353 = vld [vmem:[#allocation12 + $0x70] sm:$0xff]
      %v354 = vld [vmem:[#allocation12 + $0x78] sm:$0xff]
      %v355 = vmul.f32 %v339, 0.00048828125
      %v356 = vmul.f32 %v340, 0.00048828125
      %v357 = vmul.f32 %v341, 0.00048828125
      %v358 = vmul.f32 %v342, 0.00048828125
      %v359 = vmul.f32 %v343, 0.00048828125
      %v360 = vmul.f32 %v344, 0.00048828125
      %v361 = vmul.f32 %v345, 0.00048828125
      %v362 = vmul.f32 %v346, 0.00048828125
      %v363 = vmul.f32 %v347, 0.00048828125
      %v364 = vmul.f32 %v348, 0.00048828125
      %v365 = vmul.f32 %v349, 0.00048828125
      %v366 = vmul.f32 %v350, 0.00048828125
      %v367 = vmul.f32 %v351, 0.00048828125
      %v368 = vmul.f32 %v352, 0.00048828125
      %v369 = vmul.f32 %v353, 0.00048828125
      %v370 = vmul.f32 %v354, 0.00048828125
      %371 = vst [vmem:[#allocation12] sm:$0xff] %v355
      %372 = vst [vmem:[#allocation12 + $0x8] sm:$0xff] %v356
      %373 = vst [vmem:[#allocation12 + $0x10] sm:$0xff] %v357
      %374 = vst [vmem:[#allocation12 + $0x18] sm:$0xff] %v358
      %375 = vst [vmem:[#allocation12 + $0x20] sm:$0xff] %v359
      %376 = vst [vmem:[#allocation12 + $0x28] sm:$0xff] %v360
      %377 = vst [vmem:[#allocation12 + $0x30] sm:$0xff] %v361
      %378 = vst [vmem:[#allocation12 + $0x38] sm:$0xff] %v362
      %379 = vst [vmem:[#allocation12 + $0x40] sm:$0xff] %v363
      %380 = vst [vmem:[#allocation12 + $0x48] sm:$0xff] %v364
      %381 = vst [vmem:[#allocation12 + $0x50] sm:$0xff] %v365
      %382 = vst [vmem:[#allocation12 + $0x58] sm:$0xff] %v366
      %383 = vst [vmem:[#allocation12 + $0x60] sm:$0xff] %v367
      %384 = vst [vmem:[#allocation12 + $0x68] sm:$0xff] %v368
      %385 = vst [vmem:[#allocation12 + $0x70] sm:$0xff] %v369
      %386 = vst [vmem:[#allocation12 + $0x78] sm:$0xff] %v370
      %s387 = sld [smem:[#allocation3]]
      %s388 = sld [smem:[#allocation4]]
      %p389 = scmp.gt.s32.totalorder %s387, %s388
      %s390 = scalar_select %p389, 2.0, 1.0
      %v391 = vld [vmem:[#allocation11] sm:$0xff]
      %v392 = vld [vmem:[#allocation11 + $0x8] sm:$0xff]
      %v393 = vld [vmem:[#allocation11 + $0x10] sm:$0xff]
      %v394 = vld [vmem:[#allocation11 + $0x18] sm:$0xff]
      %v395 = vld [vmem:[#allocation11 + $0x20] sm:$0xff]
      %v396 = vld [vmem:[#allocation11 + $0x28] sm:$0xff]
      %v397 = vld [vmem:[#allocation11 + $0x30] sm:$0xff]
      %v398 = vld [vmem:[#allocation11 + $0x38] sm:$0xff]
      %v399 = vld [vmem:[#allocation11 + $0x40] sm:$0xff]
      %v400 = vld [vmem:[#allocation11 + $0x48] sm:$0xff]
      %v401 = vld [vmem:[#allocation11 + $0x50] sm:$0xff]
      %v402 = vld [vmem:[#allocation11 + $0x58] sm:$0xff]
      %v403 = vld [vmem:[#allocation11 + $0x60] sm:$0xff]
      %v404 = vld [vmem:[#allocation11 + $0x68] sm:$0xff]
      %v405 = vld [vmem:[#allocation11 + $0x70] sm:$0xff]
      %v406 = vld [vmem:[#allocation11 + $0x78] sm:$0xff]
      %v407 = vsub.f32 %v355, %v391
      %v408 = vsub.f32 %v356, %v392
      %v409 = vsub.f32 %v357, %v393
      %v410 = vsub.f32 %v358, %v394
      %v411 = vsub.f32 %v359, %v395
      %v412 = vsub.f32 %v360, %v396
      %v413 = vsub.f32 %v361, %v397
      %v414 = vsub.f32 %v362, %v398
      %v415 = vsub.f32 %v363, %v399
      %v416 = vsub.f32 %v364, %v400
      %v417 = vsub.f32 %v365, %v401
      %v418 = vsub.f32 %v366, %v402
      %v419 = vsub.f32 %v367, %v403
      %v420 = vsub.f32 %v368, %v404
      %v421 = vsub.f32 %v369, %v405
      %v422 = vsub.f32 %v370, %v406
      %v423 = vmul.f32 %v407, %v407
      %v424 = vmul.f32 %v408, %v408
      %v425 = vmul.f32 %v409, %v409
      %v426 = vmul.f32 %v410, %v410
      %v427 = vmul.f32 %v411, %v411
      %v428 = vmul.f32 %v412, %v412
      %v429 = vmul.f32 %v413, %v413
      %v430 = vmul.f32 %v414, %v414
      %v431 = vmul.f32 %v415, %v415
      %v432 = vmul.f32 %v416, %v416
      %v433 = vmul.f32 %v417, %v417
      %v434 = vmul.f32 %v418, %v418
      %v435 = vmul.f32 %v419, %v419
      %v436 = vmul.f32 %v420, %v420
      %v437 = vmul.f32 %v421, %v421
      %v438 = vmul.f32 %v422, %v422
      %v439 = vadd.f32 %v423, %v424
      %v440 = vadd.f32 %v439, %v425
      %v441 = vadd.f32 %v440, %v426
      %v442 = vadd.f32 %v441, %v427
      %v443 = vadd.f32 %v442, %v428
      %v444 = vadd.f32 %v443, %v429
      %v445 = vadd.f32 %v444, %v430
      %v446 = vadd.f32 %v445, %v431
      %v447 = vadd.f32 %v446, %v432
      %v448 = vadd.f32 %v447, %v433
      %v449 = vadd.f32 %v448, %v434
      %v450 = vadd.f32 %v449, %v435
      %v451 = vadd.f32 %v450, %v436
      %v452 = vadd.f32 %v451, %v437
      %v453 = vadd.f32 %v452, %v438
      %454 = vadd.xlane.f32.xlu0 %v453
      %v455 = vpop.xlane.xlu0 %454
      %v456 = vrot.slane %v455, 4
      %v457 = vadd.f32 %v455, %v456
      %v458 = vrot.slane %v457, 2
      %v459 = vadd.f32 %v457, %v458
      %v460 = vrot.slane %v459, 1
      %v461 = vadd.f32 %v459, %v460
      %s462 = vtos %v461
      %s463 = smul.f32 %s390, %s462
      %s464 = scalar_lea.smem [#allocation13], 0
      %465 = sst [smem:[%s464]] %s463
      %s466 = scalar_lea.vmem [#allocation11], 128
      %v467 = vld [vmem:[%s466] sm:$0xff]
      %v468 = vld [vmem:[%s466 + $0x8] sm:$0xff]
      %v469 = vld [vmem:[%s466 + $0x10] sm:$0xff]
      %v470 = vld [vmem:[%s466 + $0x18] sm:$0xff]
      %v471 = vld [vmem:[%s466 + $0x20] sm:$0xff]
      %v472 = vld [vmem:[%s466 + $0x28] sm:$0xff]
      %v473 = vld [vmem:[%s466 + $0x30] sm:$0xff]
      %v474 = vld [vmem:[%s466 + $0x38] sm:$0xff]
      %v475 = vld [vmem:[%s466 + $0x40] sm:$0xff]
      %v476 = vld [vmem:[%s466 + $0x48] sm:$0xff]
      %v477 = vld [vmem:[%s466 + $0x50] sm:$0xff]
      %v478 = vld [vmem:[%s466 + $0x58] sm:$0xff]
      %v479 = vld [vmem:[%s466 + $0x60] sm:$0xff]
      %v480 = vld [vmem:[%s466 + $0x68] sm:$0xff]
      %v481 = vld [vmem:[%s466 + $0x70] sm:$0xff]
      %v482 = vld [vmem:[%s466 + $0x78] sm:$0xff]
      %v483 = vsub.f32 %v355, %v467
      %v484 = vsub.f32 %v356, %v468
      %v485 = vsub.f32 %v357, %v469
      %v486 = vsub.f32 %v358, %v470
      %v487 = vsub.f32 %v359, %v471
      %v488 = vsub.f32 %v360, %v472
      %v489 = vsub.f32 %v361, %v473
      %v490 = vsub.f32 %v362, %v474
      %v491 = vsub.f32 %v363, %v475
      %v492 = vsub.f32 %v364, %v476
      %v493 = vsub.f32 %v365, %v477
      %v494 = vsub.f32 %v366, %v478
      %v495 = vsub.f32 %v367, %v479
      %v496 = vsub.f32 %v368, %v480
      %v497 = vsub.f32 %v369, %v481
      %v498 = vsub.f32 %v370, %v482
      %v499 = vmul.f32 %v483, %v483
      %v500 = vmul.f32 %v484, %v484
      %v501 = vmul.f32 %v485, %v485
      %v502 = vmul.f32 %v486, %v486
      %v503 = vmul.f32 %v487, %v487
      %v504 = vmul.f32 %v488, %v488
      %v505 = vmul.f32 %v489, %v489
      %v506 = vmul.f32 %v490, %v490
      %v507 = vmul.f32 %v491, %v491
      %v508 = vmul.f32 %v492, %v492
      %v509 = vmul.f32 %v493, %v493
      %v510 = vmul.f32 %v494, %v494
      %v511 = vmul.f32 %v495, %v495
      %v512 = vmul.f32 %v496, %v496
      %v513 = vmul.f32 %v497, %v497
      %v514 = vmul.f32 %v498, %v498
      %v515 = vadd.f32 %v499, %v500
      %v516 = vadd.f32 %v515, %v501
      %v517 = vadd.f32 %v516, %v502
      %v518 = vadd.f32 %v517, %v503
      %v519 = vadd.f32 %v518, %v504
      %v520 = vadd.f32 %v519, %v505
      %v521 = vadd.f32 %v520, %v506
      %v522 = vadd.f32 %v521, %v507
      %v523 = vadd.f32 %v522, %v508
      %v524 = vadd.f32 %v523, %v509
      %v525 = vadd.f32 %v524, %v510
      %v526 = vadd.f32 %v525, %v511
      %v527 = vadd.f32 %v526, %v512
      %v528 = vadd.f32 %v527, %v513
      %v529 = vadd.f32 %v528, %v514
      %530 = vadd.xlane.f32.xlu0 %v529
      %v531 = vpop.xlane.xlu0 %530
      %v532 = vrot.slane %v531, 4
      %v533 = vadd.f32 %v531, %v532
      %v534 = vrot.slane %v533, 2
      %v535 = vadd.f32 %v533, %v534
      %v536 = vrot.slane %v535, 1
      %v537 = vadd.f32 %v535, %v536
      %s538 = vtos %v537
      %s539 = smul.f32 %s390, %s538
      %s540 = scalar_lea.smem [#allocation13], 1
      %541 = sst [smem:[%s540]] %s539
    $region33: #{tpu_custom_call.1} parent=1 // pred_fallthru
      _
    // Predicated region
    $region34: #{tpu_custom_call.1} parent=1 // pred_check
      _
    $region35: #{tpu_custom_call.1} parent=1 // pred_check_branch
      %543 = sbr.rel (0) target = $region37
    $region36: #{tpu_custom_call.1} parent=1 // pred_region
      %s544 = sld [smem:[#allocation3]]
      %s545 = sld [smem:[#allocation4]]
      %s546 = smul.u32 16, %s544
      %s548 = ssub.s32 2048, 2048
      %549 = vsyncadd [#allocation7], %s548
      %s550 = sadd.s32 %s545, %s546
      %s551 = smul.addr %s550, 128
      %s552 = scalar_lea.hbm %s5, %s551
      %s553 = sshll.u32 [#allocation12], 4
      %s554 = int_to_ptr.vmem [resolvable:$true] %s553
      %559 = dma.vmem_to_hbm [thread:$0]  %s554, 2048, %s552, [#allocation7], 128, 128, 8
    $region37: #{tpu_custom_call.1} parent=1 // pred_fallthru
      _
    // Predicated region
    $region38: #{tpu_custom_call.1} parent=1 // pred_check
      _
    $region39: #{tpu_custom_call.1} parent=1 // pred_check_branch
      %561 = sbr.rel (0) target = $region41
    $region40: #{tpu_custom_call.1} parent=1 // pred_region
      %s563 = ssub.s32 16, 16
      %564 = vsyncadd [#allocation8], %s563
      %567 = dma.smem_to_hbm [#allocation13], 16, %s6, [#allocation8]
    $region41: #{tpu_custom_call.1} parent=1 // pred_fallthru
      _
    // Predicated region
    $region42: #{tpu_custom_call.1} parent=1 // pred_check
      _
    $region43: #{tpu_custom_call.1} parent=1 // pred_check_branch
      %569 = sbr.rel (0) target = $region45
    $region44: #{tpu_custom_call.1} parent=1 // pred_region
      %570 = dma.done [#allocation7], 2048
    $region45: #{tpu_custom_call.1} parent=1 // pred_fallthru
      _
    // Predicated region
    $region46: #{tpu_custom_call.1} parent=1 // pred_check
      _
    $region47: #{tpu_custom_call.1} parent=1 // pred_check_branch
      %572 = sbr.rel (0) target = $region49
    $region48: #{tpu_custom_call.1} parent=1 // pred_region
      %573 = dma.done [#allocation8], 16
    $region49: #{tpu_custom_call.1} parent=1 // pred_fallthru
      _
    %574 = sfence
    %575 = vsyncpa [#allocation6], 1
    %576 = vsyncpa [#allocation10], 1
    %577 = vsyncpa [#allocation7], 1
    %578 = vsyncpa [#allocation8], 1

</llo_original>
